<compile_context>
chip_gen: v7x
topology: tpu7x:2x2x1
jax: 0.10.0
libtpu: 0.0.40
codegen_flags: <defaults>
</compile_context>

<pallas_src>
import functools

import jax
import jax.numpy as jnp
from jax import lax
from jax.experimental import pallas as pl
from jax.experimental.pallas import tpu as pltpu

LN_EPS = 1e-5     # PyTorch nn.LayerNorm default
LANE = 128
SUBLANE = 8


def _single_buffer_kwargs():
    """pipeline_mode=pl.Buffered(1) for grid-invariant operands (halves their
    VMEM footprint); falls back to default double-buffering if unsupported."""
    try:
        kw = {"pipeline_mode": pl.Buffered(1)}
        pl.BlockSpec((8, 128), lambda i: (0, 0), **kw)
        return kw
    except Exception:
        return {}


_SINGLE_BUFFER_KW = _single_buffer_kwargs()


def _vmem_capacity_bytes():
    """Per-core VMEM capacity (128 MiB v5e/v6e, 64 MiB v7x); conservative default."""
    try:
        info = pltpu.get_tpu_info()
        cap = getattr(info, "vmem_capacity_bytes", None)
        if cap:
            return int(cap)
    except Exception:
        pass
    return 64 * 1024 * 1024


def _layernorm(x, gamma, beta, n_real, col_mask=None):
    """Two-pass LayerNorm over the last axis (PyTorch parity; no E[x^2]-mean^2
    cancellation).  `col_mask` zeroes padded feature columns so statistics use
    exactly `n_real` features; gamma/beta are zero-padded, so padded output
    columns stay exactly 0."""
    inv_n = 1.0 / float(n_real)
    mean = jnp.sum(x, axis=-1, keepdims=True) * inv_n
    xc = x - mean
    if col_mask is not None:
        xc = xc * col_mask
    var = jnp.sum(xc * xc, axis=-1, keepdims=True) * inv_n
    return xc * lax.rsqrt(var + LN_EPS) * gamma + beta


def _make_kernel(tb, n_pad, patch_dim, pd_pad, dim):
    need_k_mask = pd_pad != patch_dim

    def kernel(patches_ref, ln1_g_ref, ln1_b_ref, w_ref, b_ref,
               ln2_g_ref, ln2_b_ref, pos_ref, out_ref):
        # patches_ref: (tb*n_pad, pd_pad) bf16 ; out_ref: (tb, n_pad, dim)
        x = patches_ref[...].astype(jnp.float32)
        if need_k_mask:
            k_mask = (lax.broadcasted_iota(jnp.int32, (1, pd_pad), 1)
                      < patch_dim).astype(jnp.float32)
        else:
            k_mask = None
        xn = _layernorm(x, ln1_g_ref[...], ln1_b_ref[...], patch_dim, k_mask)
        # MXU: bf16 operands, f32 accumulation.  Elementwise math stays f32
        # (v5e VPU/EUP have no bf16 path; v6e/v7x get the bf16 MXU win).
        y = jnp.dot(xn.astype(jnp.bfloat16), w_ref[...],
                    preferred_element_type=jnp.float32) + b_ref[...]
        y = _layernorm(y, ln2_g_ref[...], ln2_b_ref[...], dim)
        # Single vectorized, sublane-aligned store of the whole patch-token
        # slab (+ positional embedding).  No per-batch unroll, no cls row.
        y = y.reshape(tb, n_pad, dim) + pos_ref[...][None]
        out_ref[...] = y.astype(out_ref.dtype)

    return kernel


@functools.partial(jax.jit, static_argnames=("patch_size", "out_dtype"))
def vis_encoder_layer(img, params, patch_size, out_dtype=jnp.float32):
    B, C, H, W = img.shape
    ph = pw = patch_size
    h, w = H // ph, W // pw
    N = h * w
    patch_dim = C * ph * pw
    dim = params["w"].shape[1]

    # ---- layout plumbing (fused by XLA under this jit) ----------------------
    # Cast to bf16 BEFORE the patchify transpose: the HBM->HBM rearrange moves
    # half the bytes.  TODO(synk): fold patchify into the kernel (grid over
    # (b, h) with an in_spec block of (1, C, ph, W)) to drop this round trip.
    patches = (img.astype(jnp.bfloat16)
                  .reshape(B, C, h, ph, w, pw)
                  .transpose(0, 2, 4, 3, 5, 1)
                  .reshape(B, N, patch_dim))

    # Zero-pad K (patch_dim) to a lane multiple and the token count to a
    # sublane multiple.  Padded K columns stay exactly 0 end-to-end (masked LN1
    # stats, zero-padded gamma/beta/W rows); padded token rows are sliced off.
    pd_pad = pl.cdiv(patch_dim, LANE) * LANE
    n_pad = pl.cdiv(N, SUBLANE) * SUBLANE
    kpad = pd_pad - patch_dim
    patches = jnp.pad(patches, ((0, 0), (0, n_pad - N), (0, kpad)))
    patches = patches.reshape(B * n_pad, pd_pad)

    ln1_g = jnp.pad(params["ln1_g"], ((0, 0), (0, kpad)))
    ln1_b = jnp.pad(params["ln1_b"], ((0, 0), (0, kpad)))
    w_p = jnp.pad(params["w"], ((0, kpad), (0, 0))).astype(jnp.bfloat16)
    pos_patch = jnp.pad(params["pos"][1:], ((0, n_pad - N), (0, 0)))

    # The output's last dim is the true `dim` (legal: full-extent last-dim
    # block).  For real ViT dims (multiples of 128) stores are lane-dense; for
    # small dim this trades masked stores for 4x write amplification + an
    # extra slice pass — a net bandwidth win.

    # ---- per-generation VMEM budget & batch-tile size ------------------------
    vmem_cap = _vmem_capacity_bytes()
    vmem_limit = min((vmem_cap * 3) // 4, 96 * 1024 * 1024)   # ~96 MiB v5e/v6e, ~48 MiB v7x
    out_bytes = jnp.dtype(out_dtype).itemsize

    # ~256 rows per step fills the MXU M dimension and amortizes the ~0.35us
    # per-step overhead.  TODO(synk): per-generation target (128 rows on v5e).
    rows_target = 256
    TB = max(1, min(B, max(1, rows_target // n_pad)))
    if B >= 2:                    # keep >= 2 grid steps so v7x's 2nd TC has work
        TB = min(TB, max(1, B // 2))
    while B % TB != 0:
        TB -= 1

    def _step_bytes(tb):
        patch_blk = tb * n_pad * pd_pad * 2           # bf16, double-buffered
        out_blk = tb * n_pad * dim * out_bytes        # double-buffered
        const_blk = (pd_pad * dim * 2                 # W bf16, single-buffered
                     + (2 * pd_pad + 3 * dim + n_pad * dim) * 4)
        return 2 * (patch_blk + out_blk) + const_blk

    while TB > 1 and _step_bytes(TB) > (vmem_limit * 3) // 5:
        TB -= 1
        while B % TB != 0:
            TB -= 1
    grid = (B // TB,)

    const = lambda i: (0, 0)                  # grid-invariant operands

    def _const_spec(shape):
        return pl.BlockSpec(shape, const, **_SINGLE_BUFFER_KW)

    out = pl.pallas_call(
        _make_kernel(TB, n_pad, patch_dim, pd_pad, dim),
        out_shape=jax.ShapeDtypeStruct((B, n_pad, dim), out_dtype),
        grid=grid,
        in_specs=[
            pl.BlockSpec((TB * n_pad, pd_pad), lambda i: (i, 0)),   # patches
            _const_spec((1, pd_pad)),                               # ln1 gamma
            _const_spec((1, pd_pad)),                               # ln1 beta
            _const_spec((pd_pad, dim)),                             # W (bf16)
            _const_spec((1, dim)),                                  # bias
            _const_spec((1, dim)),                                  # ln2 gamma
            _const_spec((1, dim)),                                  # ln2 beta
            _const_spec((n_pad, dim)),                              # pos[1:]
        ],
        out_specs=pl.BlockSpec((TB, n_pad, dim), lambda i: (i, 0, 0)),
        compiler_params=pltpu.CompilerParams(
            dimension_semantics=("parallel",),
            vmem_limit_bytes=int(vmem_limit)),
    )(patches, ln1_g, ln1_b, w_p, params["b"], params["ln2_g"],
      params["ln2_b"], pos_patch)

    # cls token + pos[0] is input-independent: build it in plain JAX; XLA fuses
    # the concat with the padded-token slice (single writeback pass).
    cls_row = (params["cls"] + params["pos"][0:1]).astype(out_dtype)   # (1, dim)
    cls_tokens = jnp.broadcast_to(cls_row[None, :, :], (B, 1, dim))
    # TODO(synk): Dropout(emb_dropout) is identity here (p=0.0 / eval mode).
    return jnp.concatenate([cls_tokens, out[:, :N, :]], axis=1)


def _reference(img, params, patch_size, mirror_kernel_casts):
    B, C, H, W = img.shape
    ph = pw = patch_size
    h, w = H // ph, W // pw
    N = h * w
    patch_dim = C * ph * pw
    dim = params["w"].shape[1]
    x = (img.reshape(B, C, h, ph, w, pw)
            .transpose(0, 2, 4, 3, 5, 1)
            .reshape(B, N, patch_dim))
    if mirror_kernel_casts:
        x = x.astype(jnp.bfloat16).astype(jnp.float32)
    else:
        x = x.astype(jnp.float32)
    x = _layernorm(x, params["ln1_g"][0], params["ln1_b"][0], patch_dim)
    if mirror_kernel_casts:
        x = jnp.einsum("bnk,kd->bnd", x.astype(jnp.bfloat16),
                       params["w"].astype(jnp.bfloat16),
                       preferred_element_type=jnp.float32) + params["b"][0]
    else:
        x = x @ params["w"] + params["b"][0]
    x = _layernorm(x, params["ln2_g"][0], params["ln2_b"][0], dim)
    cls = jnp.broadcast_to(params["cls"][None], (B, 1, dim))
    x = jnp.concatenate([cls, x], axis=1)
    return x + params["pos"][None]


if __name__ == "__main__":
    # Small config consistent with the module defaults.
    B, C = 2, 3
    image_size, patch_size = 16, 4
    dim = 32
    h = w = image_size // patch_size
    N = h * w
    patch_dim = C * patch_size * patch_size

    key = jax.random.PRNGKey(0)
    k_img, k_w, k_b, k_cls, k_pos = jax.random.split(key, 5)

    img = jax.random.normal(k_img, (B, C, image_size, image_size), jnp.float32)

    params = {
        # LayerNorm defaults: weight=1, bias=0
        "ln1_g": jnp.ones((1, patch_dim), jnp.float32),
        "ln1_b": jnp.zeros((1, patch_dim), jnp.float32),
        "w": jax.random.normal(k_w, (patch_dim, dim), jnp.float32) * 0.02,
        "b": jax.random.normal(k_b, (1, dim), jnp.float32) * 0.02,
        "ln2_g": jnp.ones((1, dim), jnp.float32),
        "ln2_b": jnp.zeros((1, dim), jnp.float32),
        # torch.randn parameters
        "cls": jax.random.normal(k_cls, (1, dim), jnp.float32),
        "pos": jax.random.normal(k_pos, (N + 1, dim), jnp.float32),
    }

    out = vis_encoder_layer(img, params, patch_size=patch_size)
    out = jax.block_until_ready(out)
    assert out.shape == (B, N + 1, dim), out.shape

    # Tight check vs a reference that mirrors the kernel's bf16 casts.
    ref_bf16 = _reference(img, params, patch_size, mirror_kernel_casts=True)
    err_b = float(jnp.max(jnp.abs(out - ref_bf16)))
    assert jnp.allclose(out, ref_bf16, atol=1e-3, rtol=1e-3), err_b

    # Loose check vs the full-f32 module math (difference is bf16 rounding of
    # the patch DMA / MXU operands only; LN2 renormalizes most of it away).
    ref_f32 = _reference(img, params, patch_size, mirror_kernel_casts=False)
    err_f = float(jnp.max(jnp.abs(out - ref_f32)))
    assert jnp.allclose(out, ref_f32, atol=5e-2, rtol=5e-2), err_f

    print("KERNEL_OK")
</pallas_src>

<mosaic_0001>
module attributes {stable_mosaic.version = 11 : i64} {
  func.func @kernel(%arg0: i32, %arg1: memref<16x128xbf16, #tpu.memory_space<vmem>>, %arg2: memref<1x128xf32, #tpu.memory_space<vmem>>, %arg3: memref<1x128xf32, #tpu.memory_space<vmem>>, %arg4: memref<128x32xbf16, #tpu.memory_space<vmem>>, %arg5: memref<1x32xf32, #tpu.memory_space<vmem>>, %arg6: memref<1x32xf32, #tpu.memory_space<vmem>>, %arg7: memref<1x32xf32, #tpu.memory_space<vmem>>, %arg8: memref<16x32xf32, #tpu.memory_space<vmem>>, %arg9: memref<1x16x32xf32, #tpu.memory_space<vmem>>) attributes {dimension_semantics = [#tpu.dimension_semantics<parallel>], iteration_bounds = array<i64: 2>, scalar_prefetch = 0 : i64, scratch_operands = 0 : i64, tpu.core_type = #tpu.core_type<tc>, window_params = [{transform_indices = @transform_0, window_bounds = array<i64: 16, 128>}, {pipeline_mode = #tpu.pipeline_mode<synchronous>, transform_indices = @transform_1, window_bounds = array<i64: 1, 128>}, {pipeline_mode = #tpu.pipeline_mode<synchronous>, transform_indices = @transform_2, window_bounds = array<i64: 1, 128>}, {pipeline_mode = #tpu.pipeline_mode<synchronous>, transform_indices = @transform_3, window_bounds = array<i64: 128, 32>}, {pipeline_mode = #tpu.pipeline_mode<synchronous>, transform_indices = @transform_4, window_bounds = array<i64: 1, 32>}, {pipeline_mode = #tpu.pipeline_mode<synchronous>, transform_indices = @transform_5, window_bounds = array<i64: 1, 32>}, {pipeline_mode = #tpu.pipeline_mode<synchronous>, transform_indices = @transform_6, window_bounds = array<i64: 1, 32>}, {pipeline_mode = #tpu.pipeline_mode<synchronous>, transform_indices = @transform_7, window_bounds = array<i64: 16, 32>}, {transform_indices = @transform_8, window_bounds = array<i64: 1, 16, 32>}]} {
    %c0 = arith.constant 0 : index
    %c0_0 = arith.constant 0 : index
    %0 = vector.load %arg1[%c0, %c0_0] : memref<16x128xbf16, #tpu.memory_space<vmem>>, vector<16x128xbf16>
    %1 = arith.extf %0 : vector<16x128xbf16> to vector<16x128xf32>
    %2 = tpu.iota {dimensions = array<i32: 1>} : vector<1x128xi32>
    %c48_i32 = arith.constant 48 : i32
    %3 = vector.broadcast %c48_i32 : i32 to vector<1x128xi32>
    %4 = arith.cmpi slt, %2, %3 : vector<1x128xi32>
    %5 = arith.extui %4 : vector<1x128xi1> to vector<1x128xi32>
    %6 = arith.sitofp %5 : vector<1x128xi32> to vector<1x128xf32>
    %c0_1 = arith.constant 0 : index
    %c0_2 = arith.constant 0 : index
    %7 = vector.load %arg2[%c0_1, %c0_2] : memref<1x128xf32, #tpu.memory_space<vmem>>, vector<1x128xf32>
    %c0_3 = arith.constant 0 : index
    %c0_4 = arith.constant 0 : index
    %8 = vector.load %arg3[%c0_3, %c0_4] : memref<1x128xf32, #tpu.memory_space<vmem>>, vector<1x128xf32>
    %cst = arith.constant dense<0.000000e+00> : vector<16xf32>
    %9 = vector.multi_reduction <add>, %1, %cst [1] : vector<16x128xf32> to vector<16xf32>
    %10 = vector.shape_cast %9 : vector<16xf32> to vector<16x1xf32>
    %cst_5 = arith.constant 0.020833334 : f32
    %11 = vector.broadcast %cst_5 : f32 to vector<16x1xf32>
    %12 = arith.mulf %10, %11 : vector<16x1xf32>
    %13 = vector.broadcast %12 : vector<16x1xf32> to vector<16x128xf32>
    %14 = arith.subf %1, %13 : vector<16x128xf32>
    %15 = vector.broadcast %6 : vector<1x128xf32> to vector<16x128xf32>
    %16 = arith.mulf %14, %15 : vector<16x128xf32>
    %17 = arith.mulf %16, %16 : vector<16x128xf32>
    %cst_6 = arith.constant dense<0.000000e+00> : vector<16xf32>
    %18 = vector.multi_reduction <add>, %17, %cst_6 [1] : vector<16x128xf32> to vector<16xf32>
    %19 = vector.shape_cast %18 : vector<16xf32> to vector<16x1xf32>
    %cst_7 = arith.constant 0.020833334 : f32
    %20 = vector.broadcast %cst_7 : f32 to vector<16x1xf32>
    %21 = arith.mulf %19, %20 : vector<16x1xf32>
    %cst_8 = arith.constant 9.99999974E-6 : f32
    %22 = vector.broadcast %cst_8 : f32 to vector<16x1xf32>
    %23 = arith.addf %21, %22 : vector<16x1xf32>
    %24 = math.rsqrt %23 : vector<16x1xf32>
    %25 = vector.broadcast %24 : vector<16x1xf32> to vector<16x128xf32>
    %26 = arith.mulf %16, %25 : vector<16x128xf32>
    %27 = vector.broadcast %7 : vector<1x128xf32> to vector<16x128xf32>
    %28 = arith.mulf %26, %27 : vector<16x128xf32>
    %29 = vector.broadcast %8 : vector<1x128xf32> to vector<16x128xf32>
    %30 = arith.addf %28, %29 : vector<16x128xf32>
    %31 = arith.truncf %30 : vector<16x128xf32> to vector<16x128xbf16>
    %c0_9 = arith.constant 0 : index
    %c0_10 = arith.constant 0 : index
    %32 = vector.load %arg4[%c0_9, %c0_10] : memref<128x32xbf16, #tpu.memory_space<vmem>>, vector<128x32xbf16>
    %cst_11 = arith.constant dense<0.000000e+00> : vector<16x32xf32>
    %33 = tpu.matmul %31, %32, %cst_11 {dimension_numbers = #tpu.dot_dimension_numbers<[1], [0], [0], [1], [0, 0, 1, 1], [], []>} : vector<16x128xbf16>, vector<128x32xbf16>, vector<16x32xf32> -> vector<16x32xf32>
    %c0_12 = arith.constant 0 : index
    %c0_13 = arith.constant 0 : index
    %34 = vector.load %arg5[%c0_12, %c0_13] : memref<1x32xf32, #tpu.memory_space<vmem>>, vector<1x32xf32>
    %35 = vector.broadcast %34 : vector<1x32xf32> to vector<16x32xf32>
    %36 = arith.addf %33, %35 : vector<16x32xf32>
    %c0_14 = arith.constant 0 : index
    %c0_15 = arith.constant 0 : index
    %37 = vector.load %arg6[%c0_14, %c0_15] : memref<1x32xf32, #tpu.memory_space<vmem>>, vector<1x32xf32>
    %c0_16 = arith.constant 0 : index
    %c0_17 = arith.constant 0 : index
    %38 = vector.load %arg7[%c0_16, %c0_17] : memref<1x32xf32, #tpu.memory_space<vmem>>, vector<1x32xf32>
    %cst_18 = arith.constant dense<0.000000e+00> : vector<16xf32>
    %39 = vector.multi_reduction <add>, %36, %cst_18 [1] : vector<16x32xf32> to vector<16xf32>
    %40 = vector.shape_cast %39 : vector<16xf32> to vector<16x1xf32>
    %cst_19 = arith.constant 3.125000e-02 : f32
    %41 = vector.broadcast %cst_19 : f32 to vector<16x1xf32>
    %42 = arith.mulf %40, %41 : vector<16x1xf32>
    %43 = vector.broadcast %42 : vector<16x1xf32> to vector<16x32xf32>
    %44 = arith.subf %36, %43 : vector<16x32xf32>
    %45 = arith.mulf %44, %44 : vector<16x32xf32>
    %cst_20 = arith.constant dense<0.000000e+00> : vector<16xf32>
    %46 = vector.multi_reduction <add>, %45, %cst_20 [1] : vector<16x32xf32> to vector<16xf32>
    %47 = vector.shape_cast %46 : vector<16xf32> to vector<16x1xf32>
    %cst_21 = arith.constant 3.125000e-02 : f32
    %48 = vector.broadcast %cst_21 : f32 to vector<16x1xf32>
    %49 = arith.mulf %47, %48 : vector<16x1xf32>
    %cst_22 = arith.constant 9.99999974E-6 : f32
    %50 = vector.broadcast %cst_22 : f32 to vector<16x1xf32>
    %51 = arith.addf %49, %50 : vector<16x1xf32>
    %52 = math.rsqrt %51 : vector<16x1xf32>
    %53 = vector.broadcast %52 : vector<16x1xf32> to vector<16x32xf32>
    %54 = arith.mulf %44, %53 : vector<16x32xf32>
    %55 = vector.broadcast %37 : vector<1x32xf32> to vector<16x32xf32>
    %56 = arith.mulf %54, %55 : vector<16x32xf32>
    %57 = vector.broadcast %38 : vector<1x32xf32> to vector<16x32xf32>
    %58 = arith.addf %56, %57 : vector<16x32xf32>
    %59 = vector.shape_cast %58 : vector<16x32xf32> to vector<1x16x32xf32>
    %c0_23 = arith.constant 0 : index
    %c0_24 = arith.constant 0 : index
    %60 = vector.load %arg8[%c0_23, %c0_24] : memref<16x32xf32, #tpu.memory_space<vmem>>, vector<16x32xf32>
    %61 = vector.shape_cast %60 : vector<16x32xf32> to vector<1x16x32xf32>
    %62 = arith.addf %59, %61 : vector<1x16x32xf32>
    %c0_25 = arith.constant 0 : index
    %c0_26 = arith.constant 0 : index
    %c0_27 = arith.constant 0 : index
    %63 = vector.load %arg9[%c0_25, %c0_26, %c0_27] : memref<1x16x32xf32, #tpu.memory_space<vmem>>, vector<1x16x32xf32>
    tpu.vector_store %arg9[%c0_25, %c0_26, %c0_27], %62 {strides = array<i32>} : memref<1x16x32xf32, #tpu.memory_space<vmem>>, vector<1x16x32xf32>,
    return
  }
  func.func @transform_0(%arg0: i32) -> (i32, i32) {
    %c0_i32 = arith.constant 0 : i32
    %c0_i32_0 = arith.constant 0 : i32
    return %arg0, %c0_i32 : i32, i32
  }
  func.func @transform_1(%arg0: i32) -> (i32, i32) {
    %c0_i32 = arith.constant 0 : i32
    %c0_i32_0 = arith.constant 0 : i32
    %c0_i32_1 = arith.constant 0 : i32
    return %c0_i32, %c0_i32_0 : i32, i32
  }
  func.func @transform_2(%arg0: i32) -> (i32, i32) {
    %c0_i32 = arith.constant 0 : i32
    %c0_i32_0 = arith.constant 0 : i32
    %c0_i32_1 = arith.constant 0 : i32
    return %c0_i32, %c0_i32_0 : i32, i32
  }
  func.func @transform_3(%arg0: i32) -> (i32, i32) {
    %c0_i32 = arith.constant 0 : i32
    %c0_i32_0 = arith.constant 0 : i32
    %c0_i32_1 = arith.constant 0 : i32
    return %c0_i32, %c0_i32_0 : i32, i32
  }
  func.func @transform_4(%arg0: i32) -> (i32, i32) {
    %c0_i32 = arith.constant 0 : i32
    %c0_i32_0 = arith.constant 0 : i32
    %c0_i32_1 = arith.constant 0 : i32
    return %c0_i32, %c0_i32_0 : i32, i32
  }
  func.func @transform_5(%arg0: i32) -> (i32, i32) {
    %c0_i32 = arith.constant 0 : i32
    %c0_i32_0 = arith.constant 0 : i32
    %c0_i32_1 = arith.constant 0 : i32
    return %c0_i32, %c0_i32_0 : i32, i32
  }
  func.func @transform_6(%arg0: i32) -> (i32, i32) {
    %c0_i32 = arith.constant 0 : i32
    %c0_i32_0 = arith.constant 0 : i32
    %c0_i32_1 = arith.constant 0 : i32
    return %c0_i32, %c0_i32_0 : i32, i32
  }
  func.func @transform_7(%arg0: i32) -> (i32, i32) {
    %c0_i32 = arith.constant 0 : i32
    %c0_i32_0 = arith.constant 0 : i32
    %c0_i32_1 = arith.constant 0 : i32
    return %c0_i32, %c0_i32_0 : i32, i32
  }
  func.func @transform_8(%arg0: i32) -> (i32, i32, i32) {
    %c0_i32 = arith.constant 0 : i32
    %c0_i32_0 = arith.constant 0 : i32
    %c0_i32_1 = arith.constant 0 : i32
    return %arg0, %c0_i32, %c0_i32_0 : i32, i32, i32
  }
}

</mosaic_0001>

<llo_original>
// kernel: vis_encoder_layer.1
$region0: #{vis_encoder_layer.1}
  #allocation0 [shape = 'u32[]', space=smem, size = 0x4, offset = 0x4, fixed_abs, tag = 'smem constant byte address 0x4 - core index']
  #allocation1 [shape = 'u32[144,128]{1,0:T(1,128)}', space=vmem, size = 0x12000, scoped, tag = 'internal scratch']
  %s0 = inlined_call_operand.vmem [shape: bf16[32,128], index: 0, kind: input, shape index: {}]
  %s1 = inlined_call_operand.vmem [shape: f32[1,128], index: 1, kind: input, shape index: {}]
  %s2 = inlined_call_operand.vmem [shape: f32[1,128], index: 2, kind: input, shape index: {}]
  %s3 = inlined_call_operand.vmem [shape: bf16[128,32], index: 3, kind: input, shape index: {}]
  %s4 = inlined_call_operand.vmem [shape: f32[1,32], index: 4, kind: input, shape index: {}]
  %s5 = inlined_call_operand.vmem [shape: f32[1,32], index: 5, kind: input, shape index: {}]
  %s6 = inlined_call_operand.vmem [shape: f32[1,32], index: 6, kind: input, shape index: {}]
  %s7 = inlined_call_operand.vmem [shape: f32[16,32], index: 7, kind: input, shape index: {}]
  %s8 = inlined_call_operand.vmem [shape: f32[2,16,32], index: 8, kind: output, shape index: {}]
  %s9 = sld [smem:[#allocation0]]
  $region65: #{vis_encoder_layer.1} parent=0
    _
  %s11 = ssub.s32 1, %s9
  %s12 = scalar_select 0, %s11, %s9
  loop: start=0, step=1, limit=4
  $region2: #{vis_encoder_layer.1} parent=0 // loop_pre_header
    _
  $region3: #{vis_encoder_layer.1} parent=0 // loop_header
    %s14 = sphi 0, %s18
    %p15 = scmp.ge.s32.totalorder %s14, 4
    %s24 = sphi 0, %s26
    %s27 = sphi 0, %s24
    %s28 = sphi 0, %s27
    %s44 = sphi 0, %s28
    %s48 = sphi 0, %s48
    %s50 = sphi 0, %s48
    %s51 = sphi 0, %s50
    %s65 = sphi 0, %s51
    %s69 = sphi 0, %s69
    %s71 = sphi 0, %s69
    %s72 = sphi 0, %s71
    %s86 = sphi 0, %s72
    %s90 = sphi 0, %s90
    %s92 = sphi 0, %s90
    %s93 = sphi 0, %s92
    %s107 = sphi 0, %s93
    %s111 = sphi 0, %s111
    %s113 = sphi 0, %s111
    %s114 = sphi 0, %s113
    %s128 = sphi 0, %s114
    %s132 = sphi 0, %s132
    %s134 = sphi 0, %s132
    %s135 = sphi 0, %s134
    %s149 = sphi 0, %s135
    %s153 = sphi 0, %s153
    %s155 = sphi 0, %s153
    %s156 = sphi 0, %s155
    %s170 = sphi 0, %s156
    %s174 = sphi 0, %s174
    %s176 = sphi 0, %s174
    %s177 = sphi 0, %s176
    %s191 = sphi 0, %s177
    %s197 = sphi 0, %s199
    %s200 = sphi 0, %s197
    %s201 = sphi 0, %s200
    %s217 = sphi 0, %s201
  $region4: #{vis_encoder_layer.1} parent=0 // loop_header_branch
    %17 = sbr.rel (%p15) target = $region8
  $region5: #{vis_encoder_layer.1} parent=0 // loop_body
    %s19 = ssub.s32 %s14, 1
    %s20 = ssub.s32 %s14, 2
    %s21 = sadd.s32 %s14, 1
    %s22 = ssub.s32 %s14, %s21
    %p23 = scmp.eq.s32.totalorder %s22, 0
    %s25 = sadd.s32 %s24, 1
    %s26 = scalar_select %p23, %s24, %s25
    %p29 = pneg %p23
    %p30 = scmp.eq.s32.totalorder %s14, 1
    %p31 = por %p29, %p30
    %p32 = scmp.ne.s32.totalorder %s24, %s27
    %p33 = scmp.eq.s32.totalorder %s14, 0
    %p34 = por %p32, %p33
    %p35 = scmp.ne.s32.totalorder %s24, %s27
    %p36 = scmp.eq.s32.totalorder %s19, 1
    %p37 = por %p35, %p36
    %p38 = scmp.ne.s32.totalorder %s27, %s28
    %p39 = scmp.eq.s32.totalorder %s19, 0
    %p40 = por %p38, %p39
    %p41 = scmp.ne.s32.totalorder %s27, %s28
    %p42 = scmp.eq.s32.totalorder %s20, 1
    %p43 = por %p41, %p42
    %p45 = scmp.ne.s32.totalorder %s28, %s44
    %p46 = scmp.eq.s32.totalorder %s20, 0
    %p47 = por %p45, %p46
    %s49 = sadd.s32 %s48, 1
    %p52 = scmp.eq.s32.totalorder %s14, 1
    %p53 = scmp.ne.s32.totalorder %s48, %s50
    %p54 = scmp.eq.s32.totalorder %s14, 0
    %p55 = por %p53, %p54
    %p56 = scmp.ne.s32.totalorder %s48, %s50
    %p57 = scmp.eq.s32.totalorder %s19, 1
    %p58 = por %p56, %p57
    %p59 = scmp.ne.s32.totalorder %s50, %s51
    %p60 = scmp.eq.s32.totalorder %s19, 0
    %p61 = por %p59, %p60
    %p62 = scmp.ne.s32.totalorder %s50, %s51
    %p63 = scmp.eq.s32.totalorder %s20, 1
    %p64 = por %p62, %p63
    %p66 = scmp.ne.s32.totalorder %s51, %s65
    %p67 = scmp.eq.s32.totalorder %s20, 0
    %p68 = por %p66, %p67
    %s70 = sadd.s32 %s69, 1
    %p73 = scmp.eq.s32.totalorder %s14, 1
    %p74 = scmp.ne.s32.totalorder %s69, %s71
    %p75 = scmp.eq.s32.totalorder %s14, 0
    %p76 = por %p74, %p75
    %p77 = scmp.ne.s32.totalorder %s69, %s71
    %p78 = scmp.eq.s32.totalorder %s19, 1
    %p79 = por %p77, %p78
    %p80 = scmp.ne.s32.totalorder %s71, %s72
    %p81 = scmp.eq.s32.totalorder %s19, 0
    %p82 = por %p80, %p81
    %p83 = scmp.ne.s32.totalorder %s71, %s72
    %p84 = scmp.eq.s32.totalorder %s20, 1
    %p85 = por %p83, %p84
    %p87 = scmp.ne.s32.totalorder %s72, %s86
    %p88 = scmp.eq.s32.totalorder %s20, 0
    %p89 = por %p87, %p88
    %s91 = sadd.s32 %s90, 1
    %p94 = scmp.eq.s32.totalorder %s14, 1
    %p95 = scmp.ne.s32.totalorder %s90, %s92
    %p96 = scmp.eq.s32.totalorder %s14, 0
    %p97 = por %p95, %p96
    %p98 = scmp.ne.s32.totalorder %s90, %s92
    %p99 = scmp.eq.s32.totalorder %s19, 1
    %p100 = por %p98, %p99
    %p101 = scmp.ne.s32.totalorder %s92, %s93
    %p102 = scmp.eq.s32.totalorder %s19, 0
    %p103 = por %p101, %p102
    %p104 = scmp.ne.s32.totalorder %s92, %s93
    %p105 = scmp.eq.s32.totalorder %s20, 1
    %p106 = por %p104, %p105
    %p108 = scmp.ne.s32.totalorder %s93, %s107
    %p109 = scmp.eq.s32.totalorder %s20, 0
    %p110 = por %p108, %p109
    %s112 = sadd.s32 %s111, 1
    %p115 = scmp.eq.s32.totalorder %s14, 1
    %p116 = scmp.ne.s32.totalorder %s111, %s113
    %p117 = scmp.eq.s32.totalorder %s14, 0
    %p118 = por %p116, %p117
    %p119 = scmp.ne.s32.totalorder %s111, %s113
    %p120 = scmp.eq.s32.totalorder %s19, 1
    %p121 = por %p119, %p120
    %p122 = scmp.ne.s32.totalorder %s113, %s114
    %p123 = scmp.eq.s32.totalorder %s19, 0
    %p124 = por %p122, %p123
    %p125 = scmp.ne.s32.totalorder %s113, %s114
    %p126 = scmp.eq.s32.totalorder %s20, 1
    %p127 = por %p125, %p126
    %p129 = scmp.ne.s32.totalorder %s114, %s128
    %p130 = scmp.eq.s32.totalorder %s20, 0
    %p131 = por %p129, %p130
    %s133 = sadd.s32 %s132, 1
    %p136 = scmp.eq.s32.totalorder %s14, 1
    %p137 = scmp.ne.s32.totalorder %s132, %s134
    %p138 = scmp.eq.s32.totalorder %s14, 0
    %p139 = por %p137, %p138
    %p140 = scmp.ne.s32.totalorder %s132, %s134
    %p141 = scmp.eq.s32.totalorder %s19, 1
    %p142 = por %p140, %p141
    %p143 = scmp.ne.s32.totalorder %s134, %s135
    %p144 = scmp.eq.s32.totalorder %s19, 0
    %p145 = por %p143, %p144
    %p146 = scmp.ne.s32.totalorder %s134, %s135
    %p147 = scmp.eq.s32.totalorder %s20, 1
    %p148 = por %p146, %p147
    %p150 = scmp.ne.s32.totalorder %s135, %s149
    %p151 = scmp.eq.s32.totalorder %s20, 0
    %p152 = por %p150, %p151
    %s154 = sadd.s32 %s153, 1
    %p157 = scmp.eq.s32.totalorder %s14, 1
    %p158 = scmp.ne.s32.totalorder %s153, %s155
    %p159 = scmp.eq.s32.totalorder %s14, 0
    %p160 = por %p158, %p159
    %p161 = scmp.ne.s32.totalorder %s153, %s155
    %p162 = scmp.eq.s32.totalorder %s19, 1
    %p163 = por %p161, %p162
    %p164 = scmp.ne.s32.totalorder %s155, %s156
    %p165 = scmp.eq.s32.totalorder %s19, 0
    %p166 = por %p164, %p165
    %p167 = scmp.ne.s32.totalorder %s155, %s156
    %p168 = scmp.eq.s32.totalorder %s20, 1
    %p169 = por %p167, %p168
    %p171 = scmp.ne.s32.totalorder %s156, %s170
    %p172 = scmp.eq.s32.totalorder %s20, 0
    %p173 = por %p171, %p172
    %s175 = sadd.s32 %s174, 1
    %p178 = scmp.eq.s32.totalorder %s14, 1
    %p179 = scmp.ne.s32.totalorder %s174, %s176
    %p180 = scmp.eq.s32.totalorder %s14, 0
    %p181 = por %p179, %p180
    %p182 = scmp.ne.s32.totalorder %s174, %s176
    %p183 = scmp.eq.s32.totalorder %s19, 1
    %p184 = por %p182, %p183
    %p185 = scmp.ne.s32.totalorder %s176, %s177
    %p186 = scmp.eq.s32.totalorder %s19, 0
    %p187 = por %p185, %p186
    %p188 = scmp.ne.s32.totalorder %s176, %s177
    %p189 = scmp.eq.s32.totalorder %s20, 1
    %p190 = por %p188, %p189
    %p192 = scmp.ne.s32.totalorder %s177, %s191
    %p193 = scmp.eq.s32.totalorder %s20, 0
    %p194 = por %p192, %p193
    %s195 = ssub.s32 %s14, %s21
    %p196 = scmp.eq.s32.totalorder %s195, 0
    %s198 = sadd.s32 %s197, 1
    %s199 = scalar_select %p196, %s197, %s198
    %p202 = pneg %p196
    %p203 = scmp.eq.s32.totalorder %s14, 1
    %p204 = por %p202, %p203
    %p205 = scmp.ne.s32.totalorder %s197, %s200
    %p206 = scmp.eq.s32.totalorder %s14, 0
    %p207 = por %p205, %p206
    %p208 = scmp.ne.s32.totalorder %s197, %s200
    %p209 = scmp.eq.s32.totalorder %s19, 1
    %p210 = por %p208, %p209
    %p211 = scmp.ne.s32.totalorder %s200, %s201
    %p212 = scmp.eq.s32.totalorder %s19, 0
    %p213 = por %p211, %p212
    %p214 = scmp.ne.s32.totalorder %s200, %s201
    %p215 = scmp.eq.s32.totalorder %s20, 1
    %p216 = por %p214, %p215
    %p218 = scmp.ne.s32.totalorder %s201, %s217
    %p219 = scmp.eq.s32.totalorder %s20, 0
    %p220 = por %p218, %p219
    %p221 = scmp.le.s32.totalorder 1, %s14
    %p222 = scmp.lt.s32.totalorder %s14, 3
    %p223 = pnand %p221, %p222
    %p224 = pneg %p223
    // Predicated region
    $region9: #{vis_encoder_layer.1} parent=5 // pred_check
      _
    $region10: #{vis_encoder_layer.1} parent=5 // pred_check_branch
      %226 = sbr.rel (%p223) target = $region12
    $region11: #{vis_encoder_layer.1} parent=5 // pred_region
      %s227 = ssub.s32 %s14, 1
      // Predicated region
      $region13: #{vis_encoder_layer.1} parent=11 // pred_check
        %p228 = pneg %p61
      $region14: #{vis_encoder_layer.1} parent=11 // pred_check_branch
        %230 = sbr.rel (%p228) target = $region16
      $region15: #{vis_encoder_layer.1} parent=11 // pred_region
        _
      $region16: #{vis_encoder_layer.1} parent=11 // pred_fallthru
        _
      // Predicated region
      $region17: #{vis_encoder_layer.1} parent=11 // pred_check
        %p231 = pneg %p82
      $region18: #{vis_encoder_layer.1} parent=11 // pred_check_branch
        %233 = sbr.rel (%p231) target = $region20
      $region19: #{vis_encoder_layer.1} parent=11 // pred_region
        _
      $region20: #{vis_encoder_layer.1} parent=11 // pred_fallthru
        _
      // Predicated region
      $region21: #{vis_encoder_layer.1} parent=11 // pred_check
        %p234 = pneg %p103
      $region22: #{vis_encoder_layer.1} parent=11 // pred_check_branch
        %236 = sbr.rel (%p234) target = $region24
      $region23: #{vis_encoder_layer.1} parent=11 // pred_region
        _
      $region24: #{vis_encoder_layer.1} parent=11 // pred_fallthru
        _
      // Predicated region
      $region25: #{vis_encoder_layer.1} parent=11 // pred_check
        %p237 = pneg %p124
      $region26: #{vis_encoder_layer.1} parent=11 // pred_check_branch
        %239 = sbr.rel (%p237) target = $region28
      $region27: #{vis_encoder_layer.1} parent=11 // pred_region
        _
      $region28: #{vis_encoder_layer.1} parent=11 // pred_fallthru
        _
      // Predicated region
      $region29: #{vis_encoder_layer.1} parent=11 // pred_check
        %p240 = pneg %p145
      $region30: #{vis_encoder_layer.1} parent=11 // pred_check_branch
        %242 = sbr.rel (%p240) target = $region32
      $region31: #{vis_encoder_layer.1} parent=11 // pred_region
        _
      $region32: #{vis_encoder_layer.1} parent=11 // pred_fallthru
        _
      // Predicated region
      $region33: #{vis_encoder_layer.1} parent=11 // pred_check
        %p243 = pneg %p166
      $region34: #{vis_encoder_layer.1} parent=11 // pred_check_branch
        %245 = sbr.rel (%p243) target = $region36
      $region35: #{vis_encoder_layer.1} parent=11 // pred_region
        _
      $region36: #{vis_encoder_layer.1} parent=11 // pred_fallthru
        _
      // Predicated region
      $region37: #{vis_encoder_layer.1} parent=11 // pred_check
        %p246 = pneg %p187
      $region38: #{vis_encoder_layer.1} parent=11 // pred_check_branch
        %248 = sbr.rel (%p246) target = $region40
      $region39: #{vis_encoder_layer.1} parent=11 // pred_region
        _
      $region40: #{vis_encoder_layer.1} parent=11 // pred_fallthru
        _
    $region12: #{vis_encoder_layer.1} parent=5 // pred_fallthru
      _
    %p249 = scmp.lt.s32.totalorder %s14, 2
    // Predicated region
    $region41: #{vis_encoder_layer.1} parent=5 // pred_check
      %p250 = pneg %p249
    $region42: #{vis_encoder_layer.1} parent=5 // pred_check_branch
      %252 = sbr.rel (%p250) target = $region44
    $region43: #{vis_encoder_layer.1} parent=5 // pred_region
      // Predicated region
      $region45: #{vis_encoder_layer.1} parent=43 // pred_check
        %p253 = pneg %p34
      $region46: #{vis_encoder_layer.1} parent=43 // pred_check_branch
        %255 = sbr.rel (%p253) target = $region48
      $region47: #{vis_encoder_layer.1} parent=43 // pred_region
        %s256 = smul.u32 2, %s14
        %p257 = scmp.lt.s32.totalorder %s256, 3
        %s258 = scalar_select %p257, %s256, 3
        %s259 = smul.addr %s258, 4
        %s260 = scalar_lea.vmem %s0, %s259
        %s261 = smul.u32 2, %s14
      $region48: #{vis_encoder_layer.1} parent=43 // pred_fallthru
        _
    $region44: #{vis_encoder_layer.1} parent=5 // pred_fallthru
      _
    %p262 = scmp.le.s32.totalorder 1, %s14
    %p263 = scmp.lt.s32.totalorder %s14, 3
    %p264 = pnand %p262, %p263
    %p265 = pneg %p264
    // Predicated region
    $region49: #{vis_encoder_layer.1} parent=5 // pred_check
      _
    $region50: #{vis_encoder_layer.1} parent=5 // pred_check_branch
      %267 = sbr.rel (%p264) target = $region52
    $region51: #{vis_encoder_layer.1} parent=5 // pred_region
      %s268 = ssub.s32 %s14, 1
      %s269 = smul.u32 2, %s19
      %p270 = scmp.lt.s32.totalorder %s269, 3
      %s271 = scalar_select %p270, %s269, 3
      %s272 = smul.addr %s271, 4
      %s273 = scalar_lea.vmem %s0, %s272
      %p274 = pneg %p40
      %p275 = pneg %p37
      %p276 = pneg %p61
      %p277 = pneg %p58
      %p278 = pneg %p82
      %p279 = pneg %p79
      %p280 = pneg %p103
      %p281 = pneg %p100
      %p282 = pneg %p124
      %p283 = pneg %p121
      %p284 = pneg %p145
      %p285 = pneg %p142
      %p286 = pneg %p166
      %p287 = pneg %p163
      %p288 = pneg %p187
      %p289 = pneg %p184
      %p290 = pneg %p213
      %p291 = pneg %p210
      %p292 = scmp.lt.s32.totalorder %s19, 1
      %s293 = scalar_select %p292, %s19, 1
      %s294 = smul.addr %s293, 2
      %s295 = smul.addr %s294, 8
      %s296 = scalar_lea.vmem %s8, %s295
      %s297 = smul.u32 2, %s19
      %p298 = scmp.lt.s32.totalorder %s297, 3
      %s299 = scalar_select %p298, %s297, 3
      %s300 = smul.addr %s299, 4
      %s301 = scalar_lea.vmem %s0, %s300
      %s302 = smul.u32 2, %s19
      %p303 = scmp.lt.s32.totalorder %s19, 1
      %s304 = scalar_select %p303, %s19, 1
      %s305 = smul.addr %s304, 2
      %s306 = smul.addr %s305, 8
      %s307 = scalar_lea.vmem %s8, %s306
      %v309 = vld [vmem:[%s301] sm:$0xf]
      %v310 = vld [vmem:[%s301 + $0x4] sm:$0xf]
      %v311 = vunpack.c.l.bf16 %v309
      %v312 = vunpack.c.l.bf16 %v310
      %v313 = vlaneseq
      %v314 = vand.u32 %v313, 127
      %vm315 = vcmp.lt.s32.totalorder %v314, 48
      %v316 = vsel %vm315, 1, 0
      %v317 = vcvt.s32.f32 %v316
      %v318 = vld [vmem:[%s1] sm:$0x1]
      %v319 = vld [vmem:[%s2] sm:$0x1]
      %320 = vadd.xlane.f32.xlu0 %v311
      %v321 = vpop.xlane.xlu0 %320
      %322 = vadd.xlane.f32.xlu0 %v312
      %v323 = vpop.xlane.xlu0 %322
      %v324 = vmul.f32 %v321, 0.020833334
      %v325 = vmul.f32 %v323, 0.020833334
      %v326 = vsub.f32 %v311, %v324
      %v327 = vsub.f32 %v312, %v325
      %v328 = vmul.f32 %v326, %v317
      %v329 = vmul.f32 %v327, %v317
      %v330 = vmul.f32 %v328, %v328
      %v331 = vmul.f32 %v329, %v329
      %332 = vadd.xlane.f32.xlu0 %v330
      %v333 = vpop.xlane.xlu0 %332
      %334 = vadd.xlane.f32.xlu0 %v331
      %v335 = vpop.xlane.xlu0 %334
      %v336 = vmul.f32 %v333, 0.020833334
      %v337 = vmul.f32 %v335, 0.020833334
      %v338 = vadd.f32 %v336, 1e-05
      %v339 = vadd.f32 %v337, 1e-05
      %v340 = vrsqrt.pop %v338
      %v341 = vrsqrt.pop %v339
      %v342 = vmul.f32 %v328, %v340
      %v343 = vmul.f32 %v329, %v341
      %v345 = vlaneseq
      %v346 = vshrl.u32 %v345, 7
      %v347 = vsub.s32 0, %v346
      %v348 = vrot.slane %v318, %v347
      %v350 = vmul.f32 %v342, %v348
      %v351 = vmul.f32 %v343, %v348
      %v353 = vlaneseq
      %v354 = vshrl.u32 %v353, 7
      %v355 = vsub.s32 0, %v354
      %v356 = vrot.slane %v319, %v355
      %v358 = vadd.f32 %v350, %v356
      %v359 = vadd.f32 %v351, %v356
      %v360 = vpack.c.bf16 %v359, %v358
      %v361 = vld [vmem:[%s3] sm:$0xf]
      %v362 = vld [vmem:[%s3 + $0x4] sm:$0xf]
      %v363 = vld [vmem:[%s3 + $0x8] sm:$0xf]
      %v364 = vld [vmem:[%s3 + $0xc] sm:$0xf]
      %v365 = vld [vmem:[%s3 + $0x10] sm:$0xf]
      %v366 = vld [vmem:[%s3 + $0x14] sm:$0xf]
      %v367 = vld [vmem:[%s3 + $0x18] sm:$0xf]
      %v368 = vld [vmem:[%s3 + $0x1c] sm:$0xf]
      %v369 = vld [vmem:[%s3 + $0x20] sm:$0xf]
      %v370 = vld [vmem:[%s3 + $0x24] sm:$0xf]
      %v371 = vld [vmem:[%s3 + $0x28] sm:$0xf]
      %v372 = vld [vmem:[%s3 + $0x2c] sm:$0xf]
      %v373 = vld [vmem:[%s3 + $0x30] sm:$0xf]
      %v374 = vld [vmem:[%s3 + $0x34] sm:$0xf]
      %v375 = vld [vmem:[%s3 + $0x38] sm:$0xf]
      %v376 = vld [vmem:[%s3 + $0x3c] sm:$0xf]
      %v377 = vld [vmem:[%s4] sm:$0x1]
      %v379 = vlaneseq
      %v380 = vshrl.u32 %v379, 7
      %v381 = vsub.s32 0, %v380
      %v382 = vrot.slane %v377, %v381
      %v400 = vunpack.c.l.b16 %v361
      %v401 = vunpack.c.l.b16 %v362
      %v402 = vunpack.c.l.b16 %v363
      %v403 = vunpack.c.l.b16 %v364
      %v404 = vunpack.c.l.b16 %v365
      %v405 = vunpack.c.l.b16 %v366
      %v406 = vunpack.c.l.b16 %v367
      %v407 = vunpack.c.l.b16 %v368
      %v408 = vunpack.c.l.b16 %v369
      %v409 = vunpack.c.l.b16 %v370
      %v410 = vunpack.c.l.b16 %v371
      %v411 = vunpack.c.l.b16 %v372
      %v412 = vunpack.c.l.b16 %v373
      %v413 = vunpack.c.l.b16 %v374
      %v414 = vunpack.c.l.b16 %v375
      %v415 = vunpack.c.l.b16 %v376
      %v416 = vpack.c.b16 %v401, %v400
      %v417 = vpack.c.b16 %v403, %v402
      %v418 = vpack.c.b16 %v405, %v404
      %v419 = vpack.c.b16 %v407, %v406
      %v420 = vpack.c.b16 %v409, %v408
      %v421 = vpack.c.b16 %v411, %v410
      %v422 = vpack.c.b16 %v413, %v412
      %v423 = vpack.c.b16 %v415, %v414
      %432 = vmatprep.subr.bf16.mxu0 0
      %433 = vmatpush1.bf16.msra.mxu0 %v416
      %434 = vmatprep.subr.bf16.mxu0 0
      %435 = vmatpush1.bf16.msra.mxu0 %v417
      %436 = vmatprep.subr.bf16.mxu0 0
      %437 = vmatpush1.bf16.msra.mxu0 %v418
      %438 = vmatprep.subr.bf16.mxu0 0
      %439 = vmatpush1.bf16.msra.mxu0 %v419
      %440 = vmatprep.subr.bf16.mxu0 0
      %441 = vmatpush1.bf16.msra.mxu0 %v420
      %442 = vmatprep.subr.bf16.mxu0 0
      %443 = vmatpush1.bf16.msra.mxu0 %v421
      %444 = vmatprep.subr.bf16.mxu0 0
      %445 = vmatpush1.bf16.msra.mxu0 %v422
      %446 = vmatprep.subr.bf16.mxu0 0
      %447 = vmatpush1.bf16.msra.mxu0 %v423
      %448 = vmatprep.subr.bf16.mxu0 0
      %449 = vmatpush1.bf16.msra.mxu0 0
      %450 = vmatprep.subr.bf16.mxu0 0
      %451 = vmatpush1.bf16.msra.mxu0 0
      %452 = vmatprep.subr.bf16.mxu0 0
      %453 = vmatpush1.bf16.msra.mxu0 0
      %454 = vmatprep.subr.bf16.mxu0 0
      %455 = vmatpush1.bf16.msra.mxu0 0
      %456 = vmatprep.subr.bf16.mxu0 0
      %457 = vmatpush1.bf16.msra.mxu0 0
      %458 = vmatprep.subr.bf16.mxu0 0
      %459 = vmatpush1.bf16.msra.mxu0 0
      %460 = vmatprep.subr.bf16.mxu0 0
      %461 = vmatpush1.bf16.msra.mxu0 0
      %462 = vmatprep.subr.bf16.mxu0 0
      %463 = vmatpush1.bf16.msra.mxu0 0
      %464 = vmatprep.mubr.bf16.mxu0 0
      %465 = vmatmul.mubr.bf16.gmra.mrb[0].mxu0 %v360
      %v466 = vpop.f32.mrb[0].mxu0
      %v467 = vadd.f32 %v382, %v466
      %v468 = vpop.f32.mrb[0].mxu0
      %v469 = vpop.f32.mrb[0].mxu0
      %v470 = vadd.f32 %v382, %v469
      %v471 = vpop.f32.mrb[0].mxu0
      %472 = vdwg.mxu0
      %v473 = vld [vmem:[%s5] sm:$0x1]
      %v474 = vld [vmem:[%s6] sm:$0x1]
      %vm475 = vcmask 261120
      %v476 = vsel %vm475, %v467, 0.0
      %477 = vadd.xlane.f32.xlu0 %v476
      %v478 = vpop.xlane.xlu0 %477
      %v479 = vsel %vm475, %v470, 0.0
      %480 = vadd.xlane.f32.xlu0 %v479
      %v481 = vpop.xlane.xlu0 %480
      %v482 = vmul.f32 %v478, 0.03125
      %v483 = vmul.f32 %v481, 0.03125
      %v484 = vsub.f32 %v467, %v482
      %v485 = vsub.f32 %v470, %v483
      %v486 = vmul.f32 %v484, %v484
      %v487 = vmul.f32 %v485, %v485
      %v488 = vsel %vm475, %v486, 0.0
      %489 = vadd.xlane.f32.xlu0 %v488
      %v490 = vpop.xlane.xlu0 %489
      %v491 = vsel %vm475, %v487, 0.0
      %492 = vadd.xlane.f32.xlu0 %v491
      %v493 = vpop.xlane.xlu0 %492
      %v494 = vmul.f32 %v490, 0.03125
      %v495 = vmul.f32 %v493, 0.03125
      %v496 = vadd.f32 %v494, 1e-05
      %v497 = vadd.f32 %v495, 1e-05
      %v498 = vrsqrt.pop %v496
      %v499 = vrsqrt.pop %v497
      %v500 = vmul.f32 %v484, %v498
      %v501 = vmul.f32 %v485, %v499
      %v503 = vlaneseq
      %v504 = vshrl.u32 %v503, 7
      %v505 = vsub.s32 0, %v504
      %v506 = vrot.slane %v473, %v505
      %v508 = vmul.f32 %v500, %v506
      %v509 = vmul.f32 %v501, %v506
      %v511 = vlaneseq
      %v512 = vshrl.u32 %v511, 7
      %v513 = vsub.s32 0, %v512
      %v514 = vrot.slane %v474, %v513
      %v516 = vadd.f32 %v508, %v514
      %v517 = vadd.f32 %v509, %v514
      %v518 = vld [vmem:[%s7] sm:$0xff]
      %v519 = vld [vmem:[%s7 + $0x8] sm:$0xff]
      %v520 = vadd.f32 %v516, %v518
      %v521 = vadd.f32 %v517, %v519
      %522 = vst.msk [vmem:[%s307] sm:$0xff] %vm475, %v520
      %523 = vst.msk [vmem:[%s307 + $0x8] sm:$0xff] %vm475, %v521
      %p524 = scmp.lt.s32.totalorder %s19, 1
      %s525 = scalar_select %p524, %s19, 1
      %s526 = smul.addr %s525, 2
      %s527 = smul.addr %s526, 8
      %s528 = scalar_lea.vmem %s8, %s527
      // Predicated region
      $region53: #{vis_encoder_layer.1} parent=51 // pred_check
        %p529 = pneg %p210
      $region54: #{vis_encoder_layer.1} parent=51 // pred_check_branch
        %531 = sbr.rel (%p529) target = $region56
      $region55: #{vis_encoder_layer.1} parent=51 // pred_region
        _
      $region56: #{vis_encoder_layer.1} parent=51 // pred_fallthru
        _
    $region52: #{vis_encoder_layer.1} parent=5 // pred_fallthru
      _
    %p532 = scmp.le.s32.totalorder 2, %s14
    // Predicated region
    $region57: #{vis_encoder_layer.1} parent=5 // pred_check
      %p533 = pneg %p532
    $region58: #{vis_encoder_layer.1} parent=5 // pred_check_branch
      %535 = sbr.rel (%p533) target = $region60
    $region59: #{vis_encoder_layer.1} parent=5 // pred_region
      %s536 = ssub.s32 %s14, 2
      // Predicated region
      $region61: #{vis_encoder_layer.1} parent=59 // pred_check
        %p537 = pneg %p216
      $region62: #{vis_encoder_layer.1} parent=59 // pred_check_branch
        %539 = sbr.rel (%p537) target = $region64
      $region63: #{vis_encoder_layer.1} parent=59 // pred_region
        %p540 = scmp.lt.s32.totalorder %s20, 1
        %s541 = scalar_select %p540, %s20, 1
        %s542 = smul.addr %s541, 2
        %s543 = smul.addr %s542, 8
        %s544 = scalar_lea.vmem %s8, %s543
      $region64: #{vis_encoder_layer.1} parent=59 // pred_fallthru
        _
    $region60: #{vis_encoder_layer.1} parent=5 // pred_fallthru
      _
  $region6: #{vis_encoder_layer.1} parent=0 // loop_footer
    %s18 = sadd.s32 1, %s14
  $region7: #{vis_encoder_layer.1} parent=0 // loop_footer_branch
    %13 = sbr.rel target = $region3
  $region8: #{vis_encoder_layer.1} parent=0 // loop_exit
    _

</llo_original>
